<compile_context>
chip_gen: v7x
topology: tpu7x:2x2x1
jax: 0.10.0
libtpu: 0.0.40
codegen_flags: <defaults>
</compile_context>

<pallas_src>
import jax
import jax.numpy as jnp
from jax.experimental import pallas as pl
from jax.experimental.pallas import tpu as pltpu


# ----------------------------- configuration -------------------------------
K_FOLD = 3          # config.k_fold
B = 2               # batch
CIN = 4             # input channels per image
H = W = 16          # spatial size
C1 = 32             # conv output channels per branch
NUM_CLASSES = 5     # num_classes

MXU_DTYPE = jnp.bfloat16   # MXU operands for the big conv matmul (f32 accumulate)


def _round_up(x, m):
    return ((x + m - 1) // m) * m


# ------------------------------ Pallas kernel -------------------------------
def _fused_doublenet_kernel(x_ref, wc_ref, pool_ref, wf_ref, bf_ref, out_ref):
    """All folds + both branches of the bagged DoubleNet, single invocation.

    x_ref    (B*P, CKpad)   bf16  im2col patches: lanes = [sag | axial | 1 | 0-pad]
    wc_ref   (CKpad, Cpad)  bf16  block-diag conv weights (all folds stacked);
                                  row 2*CK carries the per-channel conv biases
                                  (matched by the const-1 lane in x_ref)
    pool_ref (B, B*P)       f32   segment-sum selector (global-avg-pool as matmul)
    wf_ref   (Cpad, NCpad)  f32   classifier weights (folds stacked on rows),
                                  pre-scaled by 1/(P*k_fold)
    bf_ref   (1, NCpad)     f32   mean-over-folds classifier bias
    out_ref  (B, NCpad)     f32   lane-dense padded logits
    """
    # conv-as-matmul (bias folded in via the const-1 lane) for BOTH branches of
    # ALL folds in one bf16 MXU pass, then ReLU.
    h = jnp.maximum(
        jnp.dot(x_ref[...], wc_ref[...], preferred_element_type=jnp.float32),
        0.0)
    # global average pool as a segment-sum matmul (1/P folded into wf host-side)
    feat = jnp.dot(pool_ref[...], h, preferred_element_type=jnp.float32)
    # classifier for all folds + mean over folds (1/k_fold folded into wf)
    out_ref[...] = (jnp.dot(feat, wf_ref[...],
                            preferred_element_type=jnp.float32) + bf_ref[...])


# ------------------------------- host glue ----------------------------------
def _im2col3x3(x):
    """NCHW -> (B, H*W, C*9) patches, channel-major (matches OIHW flatten)."""
    b, c, h, w = x.shape
    xp = jnp.pad(x, ((0, 0), (0, 0), (1, 1), (1, 1)))
    cols = [xp[:, :, i:i + h, j:j + w] for i in range(3) for j in range(3)]
    patches = jnp.stack(cols, axis=2)              # (B, C, 9, H, W)
    patches = patches.transpose(0, 3, 4, 1, 2)     # (B, H, W, C, 9)
    return patches.reshape(b, h * w, c * 9)


def _pack_params(params, ck, p, ck2_pad, c_all_pad, nc_pad):
    """Stack/zero-pad all fold weights into the fused matmul layouts.

    Runs ONCE at model-load time (inside make_bagging_forward), never per call.
    """
    k_fold, c1 = params['ws'].shape[0], params['ws'].shape[1]
    nc = params['wf'].shape[1]
    ws2 = params['ws'].reshape(k_fold, c1, ck)      # (K, C1, CIN*3*3) OIHW flatten
    wa2 = params['wa'].reshape(k_fold, c1, ck)

    w_conv = jnp.zeros((ck2_pad, c_all_pad), jnp.float32)
    wf_all = jnp.zeros((c_all_pad, nc_pad), jnp.float32)
    scale = 1.0 / (p * k_fold)      # fold GAP 1/P and bagging 1/k_fold into wf
    for f in range(k_fold):
        c0 = f * 2 * c1
        w_conv = w_conv.at[0:ck, c0:c0 + c1].set(ws2[f].T)
        w_conv = w_conv.at[ck:2 * ck, c0 + c1:c0 + 2 * c1].set(wa2[f].T)
        # conv biases live in the row matched by the const-1 lane of x_all
        w_conv = w_conv.at[2 * ck, c0:c0 + c1].set(params['bs'][f])
        w_conv = w_conv.at[2 * ck, c0 + c1:c0 + 2 * c1].set(params['ba'][f])
        wf_all = wf_all.at[c0:c0 + 2 * c1, 0:nc].set(params['wf'][f].T * scale)
    bf_all = jnp.zeros((1, nc_pad), jnp.float32)
    bf_all = bf_all.at[0, 0:nc].set(jnp.sum(params['bf'], axis=0) / k_fold)
    return w_conv, wf_all, bf_all


def make_bagging_forward(params, *, batch, cin, h, w):
    """Pack weights once; return a jitted forward(sag_img, axial_img)."""
    k_fold, c1 = params['ws'].shape[0], params['ws'].shape[1]
    nc = params['wf'].shape[1]
    ck = cin * 9
    p = h * w
    bp = batch * p
    # TODO(synk): at real channel counts size the contraction to a multiple of
    #             256 for v6e/v7x's 2x256 MXU (128 is enough for this toy K=73).
    ck2_pad = max(128, _round_up(2 * ck + 1, 128))        # 73  -> 128
    c_all_pad = max(128, _round_up(k_fold * 2 * c1, 128))  # 192 -> 256
    nc_pad = max(128, _round_up(nc, 128))                  # 5   -> 128

    # ---- model-load-time constants (packed once, closed over by the jit) ----
    w_conv_f32, wf_all, bf_all = _pack_params(params, ck, p, ck2_pad,
                                              c_all_pad, nc_pad)
    w_conv = w_conv_f32.astype(MXU_DTYPE)
    pool = jnp.repeat(jnp.eye(batch, dtype=jnp.float32), p, axis=1)  # (B, B*P)

    flops = (2 * bp * ck2_pad * c_all_pad          # conv matmul
             + 2 * batch * bp * c_all_pad          # pool matmul
             + 2 * batch * c_all_pad * nc_pad)     # classifier matmul
    bytes_accessed = (bp * ck2_pad * 2             # x_all bf16
                      + ck2_pad * c_all_pad * 2    # w_conv bf16
                      + batch * bp * 4             # pool f32
                      + c_all_pad * nc_pad * 4     # wf_all f32
                      + nc_pad * 4                 # bf_all f32
                      + batch * nc_pad * 4)        # out f32

    kernel_call = pl.pallas_call(
        _fused_doublenet_kernel,
        out_shape=jax.ShapeDtypeStruct((batch, nc_pad), jnp.float32),
        in_specs=[pl.BlockSpec(memory_space=pltpu.MemorySpace.VMEM)] * 5,
        out_specs=pl.BlockSpec(memory_space=pltpu.MemorySpace.VMEM),
        cost_estimate=pl.CostEstimate(flops=flops, transcendentals=0,
                                      bytes_accessed=bytes_accessed),
    )

    @jax.jit
    def forward(sag_img, axial_img):
        # im2col both branches, lane-concat with the const-1 bias lane, cast to
        # bf16 and zero-pad to a full lane tile in ONE pad (no f32 scratch slab).
        sag_p = _im2col3x3(sag_img).reshape(bp, ck)
        ax_p = _im2col3x3(axial_img).reshape(bp, ck)
        ones = jnp.ones((bp, 1), jnp.float32)
        x_all = jnp.concatenate([sag_p, ax_p, ones], axis=-1).astype(MXU_DTYPE)
        x_all = jnp.pad(x_all, ((0, 0), (0, ck2_pad - (2 * ck + 1))))
        out_pad = kernel_call(x_all, w_conv, pool, wf_all, bf_all)
        return out_pad[:, :nc]

    return forward


# ----------------------- pure-JAX reference (checking) ----------------------
def _ref_forward(sag, ax, params):
    k_fold = params['ws'].shape[0]

    def branch(x, wgt, bias):
        y = jax.lax.conv_general_dilated(
            x, wgt, (1, 1), [(1, 1), (1, 1)],
            dimension_numbers=('NCHW', 'OIHW', 'NCHW'),
            precision=jax.lax.Precision.HIGHEST)
        y = jax.nn.relu(y + bias[None, :, None, None])
        return y.mean(axis=(2, 3))

    out = jnp.zeros((sag.shape[0], NUM_CLASSES), jnp.float32)
    for f in range(k_fold):
        fs = branch(sag, params['ws'][f], params['bs'][f])
        fa = branch(ax, params['wa'][f], params['ba'][f])
        feat = jnp.concatenate([fs, fa], axis=-1)
        out = out + jnp.dot(feat, params['wf'][f].T,
                            precision=jax.lax.Precision.HIGHEST) + params['bf'][f]
    return out / k_fold


# ----------------------------------- main -----------------------------------
def _init_params(key):
    ks = jax.random.split(key, 6)
    scale = 0.1
    return {
        'ws': scale * jax.random.normal(ks[0], (K_FOLD, C1, CIN, 3, 3), jnp.float32),
        'bs': scale * jax.random.normal(ks[1], (K_FOLD, C1), jnp.float32),
        'wa': scale * jax.random.normal(ks[2], (K_FOLD, C1, CIN, 3, 3), jnp.float32),
        'ba': scale * jax.random.normal(ks[3], (K_FOLD, C1), jnp.float32),
        'wf': scale * jax.random.normal(ks[4], (K_FOLD, NUM_CLASSES, 2 * C1), jnp.float32),
        'bf': scale * jax.random.normal(ks[5], (K_FOLD, NUM_CLASSES), jnp.float32),
    }


if __name__ == "__main__":
    key = jax.random.PRNGKey(0)
    k_sag, k_ax, k_par = jax.random.split(key, 3)

    sag_img = jax.random.normal(k_sag, (B, CIN, H, W), jnp.float32)
    axial_img = jax.random.normal(k_ax, (B, CIN, H, W), jnp.float32)
    params = _init_params(k_par)

    # Pack once at "model load", then call the cached jitted forward.
    forward = make_bagging_forward(params, batch=B, cin=CIN, h=H, w=W)
    out = jax.block_until_ready(forward(sag_img, axial_img))

    # Reference uses the same bf16-quantized conv operands (inputs, conv
    # weights, conv biases — the bias is folded into the bf16 weight matrix in
    # the kernel) that the kernel feeds the MXU; f32 everywhere else, so the
    # comparison is apples-to-apples.
    q = lambda a: a.astype(jnp.bfloat16).astype(jnp.float32)
    params_q = dict(params, ws=q(params['ws']), wa=q(params['wa']),
                    bs=q(params['bs']), ba=q(params['ba']))
    ref = jax.block_until_ready(
        _ref_forward(q(sag_img), q(axial_img), params_q))

    assert out.shape == (B, NUM_CLASSES)
    # 3e-4 leaves margin for the in-kernel f32 dots not pinning Precision.HIGHEST.
    assert jnp.allclose(out, ref, atol=3e-4, rtol=3e-4), (out, ref)

    print("KERNEL_OK")
</pallas_src>

<mosaic_0001>
module attributes {stable_mosaic.version = 11 : i64} {
  func.func @_fused_doublenet_kernel(%arg0: memref<512x128xbf16, #tpu.memory_space<vmem>>, %arg1: memref<128x256xbf16, #tpu.memory_space<vmem>>, %arg2: memref<2x512xf32, #tpu.memory_space<vmem>>, %arg3: memref<256x128xf32, #tpu.memory_space<vmem>>, %arg4: memref<1x128xf32, #tpu.memory_space<vmem>>, %arg5: memref<2x128xf32, #tpu.memory_space<vmem>>) attributes {dimension_semantics = [], scalar_prefetch = 0 : i64, scratch_operands = 0 : i64, tpu.core_type = #tpu.core_type<tc>} {
    %c0 = arith.constant 0 : index
    %c0_0 = arith.constant 0 : index
    %0 = vector.load %arg0[%c0, %c0_0] : memref<512x128xbf16, #tpu.memory_space<vmem>>, vector<512x128xbf16>
    %c0_1 = arith.constant 0 : index
    %c0_2 = arith.constant 0 : index
    %1 = vector.load %arg1[%c0_1, %c0_2] : memref<128x256xbf16, #tpu.memory_space<vmem>>, vector<128x256xbf16>
    %cst = arith.constant dense<0.000000e+00> : vector<512x256xf32>
    %2 = tpu.matmul %0, %1, %cst {dimension_numbers = #tpu.dot_dimension_numbers<[1], [0], [0], [1], [0, 0, 1, 1], [], []>} : vector<512x128xbf16>, vector<128x256xbf16>, vector<512x256xf32> -> vector<512x256xf32>
    %cst_3 = arith.constant 0.000000e+00 : f32
    %3 = vector.broadcast %cst_3 : f32 to vector<512x256xf32>
    %4 = arith.maximumf %2, %3 : vector<512x256xf32>
    %c0_4 = arith.constant 0 : index
    %c0_5 = arith.constant 0 : index
    %5 = vector.load %arg2[%c0_4, %c0_5] : memref<2x512xf32, #tpu.memory_space<vmem>>, vector<2x512xf32>
    %cst_6 = arith.constant dense<0.000000e+00> : vector<2x256xf32>
    %6 = tpu.matmul %5, %4, %cst_6 {dimension_numbers = #tpu.dot_dimension_numbers<[1], [0], [0], [1], [0, 0, 1, 1], [], []>} : vector<2x512xf32>, vector<512x256xf32>, vector<2x256xf32> -> vector<2x256xf32>
    %c0_7 = arith.constant 0 : index
    %c0_8 = arith.constant 0 : index
    %7 = vector.load %arg3[%c0_7, %c0_8] : memref<256x128xf32, #tpu.memory_space<vmem>>, vector<256x128xf32>
    %cst_9 = arith.constant dense<0.000000e+00> : vector<2x128xf32>
    %8 = tpu.matmul %6, %7, %cst_9 {dimension_numbers = #tpu.dot_dimension_numbers<[1], [0], [0], [1], [0, 0, 1, 1], [], []>} : vector<2x256xf32>, vector<256x128xf32>, vector<2x128xf32> -> vector<2x128xf32>
    %c0_10 = arith.constant 0 : index
    %c0_11 = arith.constant 0 : index
    %9 = vector.load %arg4[%c0_10, %c0_11] : memref<1x128xf32, #tpu.memory_space<vmem>>, vector<1x128xf32>
    %10 = vector.broadcast %9 : vector<1x128xf32> to vector<2x128xf32>
    %11 = arith.addf %8, %10 : vector<2x128xf32>
    %c0_12 = arith.constant 0 : index
    %c0_13 = arith.constant 0 : index
    %12 = vector.load %arg5[%c0_12, %c0_13] : memref<2x128xf32, #tpu.memory_space<vmem>>, vector<2x128xf32>
    tpu.vector_store %arg5[%c0_12, %c0_13], %11 {strides = array<i32>} : memref<2x128xf32, #tpu.memory_space<vmem>>, vector<2x128xf32>,
    return
  }
}

</mosaic_0001>

<llo_original>
// kernel: forward.1
$region0: #{forward.1}
  #allocation0 [shape = 'u32[]', space=smem, size = 0x4, offset = 0x4, fixed_abs, tag = 'smem constant byte address 0x4 - core index']
  #allocation1 [shape = 'u32[144,128]{1,0:T(1,128)}', space=vmem, size = 0x12000, scoped, tag = 'internal scratch']
  %s0 = inlined_call_operand.vmem [shape: bf16[512,128], index: 0, kind: input, shape index: {}]
  %s1 = inlined_call_operand.vmem [shape: bf16[128,256], index: 1, kind: input, shape index: {}]
  %s2 = inlined_call_operand.vmem [shape: f32[2,512], index: 2, kind: input, shape index: {}]
  %s3 = inlined_call_operand.vmem [shape: f32[256,128], index: 3, kind: input, shape index: {}]
  %s4 = inlined_call_operand.vmem [shape: f32[1,128], index: 4, kind: input, shape index: {}]
  %s5 = inlined_call_operand.hbm [shape: f32[2,128], index: 5, kind: output, shape index: {}]
  %s6 = sld [smem:[#allocation0]]
  $region30: #{forward.1} parent=0
    _
  %s8 = ssub.s32 1, %s6
  %s9 = scalar_select 0, %s8, %s6
  $region1: #{forward.1} parent=0
    #allocation2 [shape = 'u8[1024]{0}', space=vmem, size = 0x400, scoped, tag = 'output window, operand 0, single buffered']
    #allocation3 [shape = 's32[1]{0}', space=sflag, size = 0x4, scoped, tag = 'scoped memory for forward.1']
    %10 = vsyncpa [#allocation3], 0
    // Predicated region
    $region2: #{forward.1} parent=1 // pred_check
      _
    $region3: #{forward.1} parent=1 // pred_check_branch
      %12 = sbr.rel (0) target = $region5
    $region4: #{forward.1} parent=1 // pred_region
      _
    $region5: #{forward.1} parent=1 // pred_fallthru
      _
    // Predicated region
    $region6: #{forward.1} parent=1 // pred_check
      _
    $region7: #{forward.1} parent=1 // pred_check_branch
      %14 = sbr.rel (0) target = $region9
    $region8: #{forward.1} parent=1 // pred_region
      _
    $region9: #{forward.1} parent=1 // pred_fallthru
      _
    // Predicated region
    $region10: #{forward.1} parent=1 // pred_check
      _
    $region11: #{forward.1} parent=1 // pred_check_branch
      %16 = sbr.rel (0) target = $region13
    $region12: #{forward.1} parent=1 // pred_region
      _
    $region13: #{forward.1} parent=1 // pred_fallthru
      _
    // Predicated region
    $region14: #{forward.1} parent=1 // pred_check
      _
    $region15: #{forward.1} parent=1 // pred_check_branch
      %18 = sbr.rel (0) target = $region17
    $region16: #{forward.1} parent=1 // pred_region
      _
    $region17: #{forward.1} parent=1 // pred_fallthru
      _
    // Predicated region
    $region18: #{forward.1} parent=1 // pred_check
      _
    $region19: #{forward.1} parent=1 // pred_check_branch
      %20 = sbr.rel (0) target = $region21
    $region20: #{forward.1} parent=1 // pred_region
      _
    $region21: #{forward.1} parent=1 // pred_fallthru
      _
    %v22 = vld [vmem:[%s0] sm:$0xf]
    %v23 = vld [vmem:[%s0 + $0x4] sm:$0xf]
    %v24 = vld [vmem:[%s0 + $0x8] sm:$0xf]
    %v25 = vld [vmem:[%s0 + $0xc] sm:$0xf]
    %v26 = vld [vmem:[%s0 + $0x10] sm:$0xf]
    %v27 = vld [vmem:[%s0 + $0x14] sm:$0xf]
    %v28 = vld [vmem:[%s0 + $0x18] sm:$0xf]
    %v29 = vld [vmem:[%s0 + $0x1c] sm:$0xf]
    %v30 = vld [vmem:[%s0 + $0x20] sm:$0xf]
    %v31 = vld [vmem:[%s0 + $0x24] sm:$0xf]
    %v32 = vld [vmem:[%s0 + $0x28] sm:$0xf]
    %v33 = vld [vmem:[%s0 + $0x2c] sm:$0xf]
    %v34 = vld [vmem:[%s0 + $0x30] sm:$0xf]
    %v35 = vld [vmem:[%s0 + $0x34] sm:$0xf]
    %v36 = vld [vmem:[%s0 + $0x38] sm:$0xf]
    %v37 = vld [vmem:[%s0 + $0x3c] sm:$0xf]
    %v38 = vld [vmem:[%s0 + $0x40] sm:$0xf]
    %v39 = vld [vmem:[%s0 + $0x44] sm:$0xf]
    %v40 = vld [vmem:[%s0 + $0x48] sm:$0xf]
    %v41 = vld [vmem:[%s0 + $0x4c] sm:$0xf]
    %v42 = vld [vmem:[%s0 + $0x50] sm:$0xf]
    %v43 = vld [vmem:[%s0 + $0x54] sm:$0xf]
    %v44 = vld [vmem:[%s0 + $0x58] sm:$0xf]
    %v45 = vld [vmem:[%s0 + $0x5c] sm:$0xf]
    %v46 = vld [vmem:[%s0 + $0x60] sm:$0xf]
    %v47 = vld [vmem:[%s0 + $0x64] sm:$0xf]
    %v48 = vld [vmem:[%s0 + $0x68] sm:$0xf]
    %v49 = vld [vmem:[%s0 + $0x6c] sm:$0xf]
    %v50 = vld [vmem:[%s0 + $0x70] sm:$0xf]
    %v51 = vld [vmem:[%s0 + $0x74] sm:$0xf]
    %v52 = vld [vmem:[%s0 + $0x78] sm:$0xf]
    %v53 = vld [vmem:[%s0 + $0x7c] sm:$0xf]
    %v54 = vld [vmem:[%s0 + $0x80] sm:$0xf]
    %v55 = vld [vmem:[%s0 + $0x84] sm:$0xf]
    %v56 = vld [vmem:[%s0 + $0x88] sm:$0xf]
    %v57 = vld [vmem:[%s0 + $0x8c] sm:$0xf]
    %v58 = vld [vmem:[%s0 + $0x90] sm:$0xf]
    %v59 = vld [vmem:[%s0 + $0x94] sm:$0xf]
    %v60 = vld [vmem:[%s0 + $0x98] sm:$0xf]
    %v61 = vld [vmem:[%s0 + $0x9c] sm:$0xf]
    %v62 = vld [vmem:[%s0 + $0xa0] sm:$0xf]
    %v63 = vld [vmem:[%s0 + $0xa4] sm:$0xf]
    %v64 = vld [vmem:[%s0 + $0xa8] sm:$0xf]
    %v65 = vld [vmem:[%s0 + $0xac] sm:$0xf]
    %v66 = vld [vmem:[%s0 + $0xb0] sm:$0xf]
    %v67 = vld [vmem:[%s0 + $0xb4] sm:$0xf]
    %v68 = vld [vmem:[%s0 + $0xb8] sm:$0xf]
    %v69 = vld [vmem:[%s0 + $0xbc] sm:$0xf]
    %v70 = vld [vmem:[%s0 + $0xc0] sm:$0xf]
    %v71 = vld [vmem:[%s0 + $0xc4] sm:$0xf]
    %v72 = vld [vmem:[%s0 + $0xc8] sm:$0xf]
    %v73 = vld [vmem:[%s0 + $0xcc] sm:$0xf]
    %v74 = vld [vmem:[%s0 + $0xd0] sm:$0xf]
    %v75 = vld [vmem:[%s0 + $0xd4] sm:$0xf]
    %v76 = vld [vmem:[%s0 + $0xd8] sm:$0xf]
    %v77 = vld [vmem:[%s0 + $0xdc] sm:$0xf]
    %v78 = vld [vmem:[%s0 + $0xe0] sm:$0xf]
    %v79 = vld [vmem:[%s0 + $0xe4] sm:$0xf]
    %v80 = vld [vmem:[%s0 + $0xe8] sm:$0xf]
    %v81 = vld [vmem:[%s0 + $0xec] sm:$0xf]
    %v82 = vld [vmem:[%s0 + $0xf0] sm:$0xf]
    %v83 = vld [vmem:[%s0 + $0xf4] sm:$0xf]
    %v84 = vld [vmem:[%s0 + $0xf8] sm:$0xf]
    %v85 = vld [vmem:[%s0 + $0xfc] sm:$0xf]
    %v86 = vld [vmem:[%s1] sm:$0xff]
    %v87 = vld [vmem:[%s1 + $0x8] sm:$0xff]
    %v88 = vld [vmem:[%s1 + $0x10] sm:$0xff]
    %v89 = vld [vmem:[%s1 + $0x18] sm:$0xff]
    %v90 = vld [vmem:[%s1 + $0x20] sm:$0xff]
    %v91 = vld [vmem:[%s1 + $0x28] sm:$0xff]
    %v92 = vld [vmem:[%s1 + $0x30] sm:$0xff]
    %v93 = vld [vmem:[%s1 + $0x38] sm:$0xff]
    %v94 = vld [vmem:[%s1 + $0x40] sm:$0xff]
    %v95 = vld [vmem:[%s1 + $0x48] sm:$0xff]
    %v96 = vld [vmem:[%s1 + $0x50] sm:$0xff]
    %v97 = vld [vmem:[%s1 + $0x58] sm:$0xff]
    %v98 = vld [vmem:[%s1 + $0x60] sm:$0xff]
    %v99 = vld [vmem:[%s1 + $0x68] sm:$0xff]
    %v100 = vld [vmem:[%s1 + $0x70] sm:$0xff]
    %v101 = vld [vmem:[%s1 + $0x78] sm:$0xff]
    %v166 = vunpack.c.l.b16 %v22
    %v167 = vunpack.c.l.b16 %v23
    %v168 = vunpack.c.l.b16 %v24
    %v169 = vunpack.c.l.b16 %v25
    %v170 = vunpack.c.l.b16 %v26
    %v171 = vunpack.c.l.b16 %v27
    %v172 = vunpack.c.l.b16 %v28
    %v173 = vunpack.c.l.b16 %v29
    %v174 = vunpack.c.l.b16 %v30
    %v175 = vunpack.c.l.b16 %v31
    %v176 = vunpack.c.l.b16 %v32
    %v177 = vunpack.c.l.b16 %v33
    %v178 = vunpack.c.l.b16 %v34
    %v179 = vunpack.c.l.b16 %v35
    %v180 = vunpack.c.l.b16 %v36
    %v181 = vunpack.c.l.b16 %v37
    %v182 = vunpack.c.l.b16 %v38
    %v183 = vunpack.c.l.b16 %v39
    %v184 = vunpack.c.l.b16 %v40
    %v185 = vunpack.c.l.b16 %v41
    %v186 = vunpack.c.l.b16 %v42
    %v187 = vunpack.c.l.b16 %v43
    %v188 = vunpack.c.l.b16 %v44
    %v189 = vunpack.c.l.b16 %v45
    %v190 = vunpack.c.l.b16 %v46
    %v191 = vunpack.c.l.b16 %v47
    %v192 = vunpack.c.l.b16 %v48
    %v193 = vunpack.c.l.b16 %v49
    %v194 = vunpack.c.l.b16 %v50
    %v195 = vunpack.c.l.b16 %v51
    %v196 = vunpack.c.l.b16 %v52
    %v197 = vunpack.c.l.b16 %v53
    %v198 = vunpack.c.l.b16 %v54
    %v199 = vunpack.c.l.b16 %v55
    %v200 = vunpack.c.l.b16 %v56
    %v201 = vunpack.c.l.b16 %v57
    %v202 = vunpack.c.l.b16 %v58
    %v203 = vunpack.c.l.b16 %v59
    %v204 = vunpack.c.l.b16 %v60
    %v205 = vunpack.c.l.b16 %v61
    %v206 = vunpack.c.l.b16 %v62
    %v207 = vunpack.c.l.b16 %v63
    %v208 = vunpack.c.l.b16 %v64
    %v209 = vunpack.c.l.b16 %v65
    %v210 = vunpack.c.l.b16 %v66
    %v211 = vunpack.c.l.b16 %v67
    %v212 = vunpack.c.l.b16 %v68
    %v213 = vunpack.c.l.b16 %v69
    %v214 = vunpack.c.l.b16 %v70
    %v215 = vunpack.c.l.b16 %v71
    %v216 = vunpack.c.l.b16 %v72
    %v217 = vunpack.c.l.b16 %v73
    %v218 = vunpack.c.l.b16 %v74
    %v219 = vunpack.c.l.b16 %v75
    %v220 = vunpack.c.l.b16 %v76
    %v221 = vunpack.c.l.b16 %v77
    %v222 = vunpack.c.l.b16 %v78
    %v223 = vunpack.c.l.b16 %v79
    %v224 = vunpack.c.l.b16 %v80
    %v225 = vunpack.c.l.b16 %v81
    %v226 = vunpack.c.l.b16 %v82
    %v227 = vunpack.c.l.b16 %v83
    %v228 = vunpack.c.l.b16 %v84
    %v229 = vunpack.c.l.b16 %v85
    %v230 = vpack.c.b16 %v167, %v166
    %v231 = vpack.c.b16 %v169, %v168
    %v232 = vpack.c.b16 %v171, %v170
    %v233 = vpack.c.b16 %v173, %v172
    %v234 = vpack.c.b16 %v175, %v174
    %v235 = vpack.c.b16 %v177, %v176
    %v236 = vpack.c.b16 %v179, %v178
    %v237 = vpack.c.b16 %v181, %v180
    %v238 = vpack.c.b16 %v183, %v182
    %v239 = vpack.c.b16 %v185, %v184
    %v240 = vpack.c.b16 %v187, %v186
    %v241 = vpack.c.b16 %v189, %v188
    %v242 = vpack.c.b16 %v191, %v190
    %v243 = vpack.c.b16 %v193, %v192
    %v244 = vpack.c.b16 %v195, %v194
    %v245 = vpack.c.b16 %v197, %v196
    %v246 = vpack.c.b16 %v199, %v198
    %v247 = vpack.c.b16 %v201, %v200
    %v248 = vpack.c.b16 %v203, %v202
    %v249 = vpack.c.b16 %v205, %v204
    %v250 = vpack.c.b16 %v207, %v206
    %v251 = vpack.c.b16 %v209, %v208
    %v252 = vpack.c.b16 %v211, %v210
    %v253 = vpack.c.b16 %v213, %v212
    %v254 = vpack.c.b16 %v215, %v214
    %v255 = vpack.c.b16 %v217, %v216
    %v256 = vpack.c.b16 %v219, %v218
    %v257 = vpack.c.b16 %v221, %v220
    %v258 = vpack.c.b16 %v223, %v222
    %v259 = vpack.c.b16 %v225, %v224
    %v260 = vpack.c.b16 %v227, %v226
    %v261 = vpack.c.b16 %v229, %v228
    %v310 = vunpack.c.l.b16 %v86
    %v311 = vunpack.c.h.b16 %v86
    %v312 = vunpack.c.l.b16 %v87
    %v313 = vunpack.c.h.b16 %v87
    %v314 = vunpack.c.l.b16 %v88
    %v315 = vunpack.c.h.b16 %v88
    %v316 = vunpack.c.l.b16 %v89
    %v317 = vunpack.c.h.b16 %v89
    %v318 = vunpack.c.l.b16 %v90
    %v319 = vunpack.c.h.b16 %v90
    %v320 = vunpack.c.l.b16 %v91
    %v321 = vunpack.c.h.b16 %v91
    %v322 = vunpack.c.l.b16 %v92
    %v323 = vunpack.c.h.b16 %v92
    %v324 = vunpack.c.l.b16 %v93
    %v325 = vunpack.c.h.b16 %v93
    %v326 = vunpack.c.l.b16 %v94
    %v327 = vunpack.c.h.b16 %v94
    %v328 = vunpack.c.l.b16 %v95
    %v329 = vunpack.c.h.b16 %v95
    %v330 = vunpack.c.l.b16 %v96
    %v331 = vunpack.c.h.b16 %v96
    %v332 = vunpack.c.l.b16 %v97
    %v333 = vunpack.c.h.b16 %v97
    %v334 = vunpack.c.l.b16 %v98
    %v335 = vunpack.c.h.b16 %v98
    %v336 = vunpack.c.l.b16 %v99
    %v337 = vunpack.c.h.b16 %v99
    %v338 = vunpack.c.l.b16 %v100
    %v339 = vunpack.c.h.b16 %v100
    %v340 = vunpack.c.l.b16 %v101
    %v341 = vunpack.c.h.b16 %v101
    %v342 = vpack.c.b16 %v312, %v310
    %v343 = vpack.c.b16 %v313, %v311
    %v344 = vpack.c.b16 %v316, %v314
    %v345 = vpack.c.b16 %v317, %v315
    %v346 = vpack.c.b16 %v320, %v318
    %v347 = vpack.c.b16 %v321, %v319
    %v348 = vpack.c.b16 %v324, %v322
    %v349 = vpack.c.b16 %v325, %v323
    %v350 = vpack.c.b16 %v328, %v326
    %v351 = vpack.c.b16 %v329, %v327
    %v352 = vpack.c.b16 %v332, %v330
    %v353 = vpack.c.b16 %v333, %v331
    %v354 = vpack.c.b16 %v336, %v334
    %v355 = vpack.c.b16 %v337, %v335
    %v356 = vpack.c.b16 %v340, %v338
    %v357 = vpack.c.b16 %v341, %v339
    %374 = vmatprep.subr.bf16.mxu0 %v343
    %375 = vmatpush1.bf16.msra.mxu0 %v342
    %376 = vmatprep.subr.bf16.mxu0 %v345
    %377 = vmatpush1.bf16.msra.mxu0 %v344
    %378 = vmatprep.subr.bf16.mxu0 %v347
    %379 = vmatpush1.bf16.msra.mxu0 %v346
    %380 = vmatprep.subr.bf16.mxu0 %v349
    %381 = vmatpush1.bf16.msra.mxu0 %v348
    %382 = vmatprep.subr.bf16.mxu0 %v351
    %383 = vmatpush1.bf16.msra.mxu0 %v350
    %384 = vmatprep.subr.bf16.mxu0 %v353
    %385 = vmatpush1.bf16.msra.mxu0 %v352
    %386 = vmatprep.subr.bf16.mxu0 %v355
    %387 = vmatpush1.bf16.msra.mxu0 %v354
    %388 = vmatprep.subr.bf16.mxu0 %v357
    %389 = vmatpush1.bf16.msra.mxu0 %v356
    %390 = vmatprep.subr.bf16.mxu0 0
    %391 = vmatpush1.bf16.msra.mxu0 0
    %392 = vmatprep.subr.bf16.mxu0 0
    %393 = vmatpush1.bf16.msra.mxu0 0
    %394 = vmatprep.subr.bf16.mxu0 0
    %395 = vmatpush1.bf16.msra.mxu0 0
    %396 = vmatprep.subr.bf16.mxu0 0
    %397 = vmatpush1.bf16.msra.mxu0 0
    %398 = vmatprep.subr.bf16.mxu0 0
    %399 = vmatpush1.bf16.msra.mxu0 0
    %400 = vmatprep.subr.bf16.mxu0 0
    %401 = vmatpush1.bf16.msra.mxu0 0
    %402 = vmatprep.subr.bf16.mxu0 0
    %403 = vmatpush1.bf16.msra.mxu0 0
    %404 = vmatprep.subr.bf16.mxu0 0
    %405 = vmatpush1.bf16.msra.mxu0 0
    %406 = vmatprep.mubr.bf16.mxu0 0
    %407 = vmatmul.mubr.bf16.gmra.mrb[0].mxu0 %v230
    %v408 = vpop.f32.mrb[0].mxu0
    %v409 = vadd.f32 0.0, %v408
    %v410 = vpop.f32.mrb[0].mxu0
    %v411 = vadd.f32 0.0, %v410
    %v412 = vpop.f32.mrb[0].mxu0
    %v413 = vadd.f32 0.0, %v412
    %v414 = vpop.f32.mrb[0].mxu0
    %v415 = vadd.f32 0.0, %v414
    %416 = vmatprep.mubr.bf16.mxu0 0
    %417 = vmatmul.mubr.bf16.gmra.mrb[0].mxu0 %v231
    %v418 = vpop.f32.mrb[0].mxu0
    %v419 = vadd.f32 0.0, %v418
    %v420 = vpop.f32.mrb[0].mxu0
    %v421 = vadd.f32 0.0, %v420
    %v422 = vpop.f32.mrb[0].mxu0
    %v423 = vadd.f32 0.0, %v422
    %v424 = vpop.f32.mrb[0].mxu0
    %v425 = vadd.f32 0.0, %v424
    %426 = vmatprep.mubr.bf16.mxu0 0
    %427 = vmatmul.mubr.bf16.gmra.mrb[0].mxu0 %v232
    %v428 = vpop.f32.mrb[0].mxu0
    %v429 = vadd.f32 0.0, %v428
    %v430 = vpop.f32.mrb[0].mxu0
    %v431 = vadd.f32 0.0, %v430
    %v432 = vpop.f32.mrb[0].mxu0
    %v433 = vadd.f32 0.0, %v432
    %v434 = vpop.f32.mrb[0].mxu0
    %v435 = vadd.f32 0.0, %v434
    %436 = vmatprep.mubr.bf16.mxu0 0
    %437 = vmatmul.mubr.bf16.gmra.mrb[0].mxu0 %v233
    %v438 = vpop.f32.mrb[0].mxu0
    %v439 = vadd.f32 0.0, %v438
    %v440 = vpop.f32.mrb[0].mxu0
    %v441 = vadd.f32 0.0, %v440
    %v442 = vpop.f32.mrb[0].mxu0
    %v443 = vadd.f32 0.0, %v442
    %v444 = vpop.f32.mrb[0].mxu0
    %v445 = vadd.f32 0.0, %v444
    %446 = vmatprep.mubr.bf16.mxu0 0
    %447 = vmatmul.mubr.bf16.gmra.mrb[0].mxu0 %v234
    %v448 = vpop.f32.mrb[0].mxu0
    %v449 = vadd.f32 0.0, %v448
    %v450 = vpop.f32.mrb[0].mxu0
    %v451 = vadd.f32 0.0, %v450
    %v452 = vpop.f32.mrb[0].mxu0
    %v453 = vadd.f32 0.0, %v452
    %v454 = vpop.f32.mrb[0].mxu0
    %v455 = vadd.f32 0.0, %v454
    %456 = vmatprep.mubr.bf16.mxu0 0
    %457 = vmatmul.mubr.bf16.gmra.mrb[0].mxu0 %v235
    %v458 = vpop.f32.mrb[0].mxu0
    %v459 = vadd.f32 0.0, %v458
    %v460 = vpop.f32.mrb[0].mxu0
    %v461 = vadd.f32 0.0, %v460
    %v462 = vpop.f32.mrb[0].mxu0
    %v463 = vadd.f32 0.0, %v462
    %v464 = vpop.f32.mrb[0].mxu0
    %v465 = vadd.f32 0.0, %v464
    %466 = vmatprep.mubr.bf16.mxu0 0
    %467 = vmatmul.mubr.bf16.gmra.mrb[0].mxu0 %v236
    %v468 = vpop.f32.mrb[0].mxu0
    %v469 = vadd.f32 0.0, %v468
    %v470 = vpop.f32.mrb[0].mxu0
    %v471 = vadd.f32 0.0, %v470
    %v472 = vpop.f32.mrb[0].mxu0
    %v473 = vadd.f32 0.0, %v472
    %v474 = vpop.f32.mrb[0].mxu0
    %v475 = vadd.f32 0.0, %v474
    %476 = vmatprep.mubr.bf16.mxu0 0
    %477 = vmatmul.mubr.bf16.gmra.mrb[0].mxu0 %v237
    %v478 = vpop.f32.mrb[0].mxu0
    %v479 = vadd.f32 0.0, %v478
    %v480 = vpop.f32.mrb[0].mxu0
    %v481 = vadd.f32 0.0, %v480
    %v482 = vpop.f32.mrb[0].mxu0
    %v483 = vadd.f32 0.0, %v482
    %v484 = vpop.f32.mrb[0].mxu0
    %v485 = vadd.f32 0.0, %v484
    %486 = vmatprep.mubr.bf16.mxu0 0
    %487 = vmatmul.mubr.bf16.gmra.mrb[0].mxu0 %v238
    %v488 = vpop.f32.mrb[0].mxu0
    %v489 = vadd.f32 0.0, %v488
    %v490 = vpop.f32.mrb[0].mxu0
    %v491 = vadd.f32 0.0, %v490
    %v492 = vpop.f32.mrb[0].mxu0
    %v493 = vadd.f32 0.0, %v492
    %v494 = vpop.f32.mrb[0].mxu0
    %v495 = vadd.f32 0.0, %v494
    %496 = vmatprep.mubr.bf16.mxu0 0
    %497 = vmatmul.mubr.bf16.gmra.mrb[0].mxu0 %v239
    %v498 = vpop.f32.mrb[0].mxu0
    %v499 = vadd.f32 0.0, %v498
    %v500 = vpop.f32.mrb[0].mxu0
    %v501 = vadd.f32 0.0, %v500
    %v502 = vpop.f32.mrb[0].mxu0
    %v503 = vadd.f32 0.0, %v502
    %v504 = vpop.f32.mrb[0].mxu0
    %v505 = vadd.f32 0.0, %v504
    %506 = vmatprep.mubr.bf16.mxu0 0
    %507 = vmatmul.mubr.bf16.gmra.mrb[0].mxu0 %v240
    %v508 = vpop.f32.mrb[0].mxu0
    %v509 = vadd.f32 0.0, %v508
    %v510 = vpop.f32.mrb[0].mxu0
    %v511 = vadd.f32 0.0, %v510
    %v512 = vpop.f32.mrb[0].mxu0
    %v513 = vadd.f32 0.0, %v512
    %v514 = vpop.f32.mrb[0].mxu0
    %v515 = vadd.f32 0.0, %v514
    %516 = vmatprep.mubr.bf16.mxu0 0
    %517 = vmatmul.mubr.bf16.gmra.mrb[0].mxu0 %v241
    %v518 = vpop.f32.mrb[0].mxu0
    %v519 = vadd.f32 0.0, %v518
    %v520 = vpop.f32.mrb[0].mxu0
    %v521 = vadd.f32 0.0, %v520
    %v522 = vpop.f32.mrb[0].mxu0
    %v523 = vadd.f32 0.0, %v522
    %v524 = vpop.f32.mrb[0].mxu0
    %v525 = vadd.f32 0.0, %v524
    %526 = vmatprep.mubr.bf16.mxu0 0
    %527 = vmatmul.mubr.bf16.gmra.mrb[0].mxu0 %v242
    %v528 = vpop.f32.mrb[0].mxu0
    %v529 = vadd.f32 0.0, %v528
    %v530 = vpop.f32.mrb[0].mxu0
    %v531 = vadd.f32 0.0, %v530
    %v532 = vpop.f32.mrb[0].mxu0
    %v533 = vadd.f32 0.0, %v532
    %v534 = vpop.f32.mrb[0].mxu0
    %v535 = vadd.f32 0.0, %v534
    %536 = vmatprep.mubr.bf16.mxu0 0
    %537 = vmatmul.mubr.bf16.gmra.mrb[0].mxu0 %v243
    %v538 = vpop.f32.mrb[0].mxu0
    %v539 = vadd.f32 0.0, %v538
    %v540 = vpop.f32.mrb[0].mxu0
    %v541 = vadd.f32 0.0, %v540
    %v542 = vpop.f32.mrb[0].mxu0
    %v543 = vadd.f32 0.0, %v542
    %v544 = vpop.f32.mrb[0].mxu0
    %v545 = vadd.f32 0.0, %v544
    %546 = vmatprep.mubr.bf16.mxu0 0
    %547 = vmatmul.mubr.bf16.gmra.mrb[0].mxu0 %v244
    %v548 = vpop.f32.mrb[0].mxu0
    %v549 = vadd.f32 0.0, %v548
    %v550 = vpop.f32.mrb[0].mxu0
    %v551 = vadd.f32 0.0, %v550
    %v552 = vpop.f32.mrb[0].mxu0
    %v553 = vadd.f32 0.0, %v552
    %v554 = vpop.f32.mrb[0].mxu0
    %v555 = vadd.f32 0.0, %v554
    %556 = vmatprep.mubr.bf16.mxu0 0
    %557 = vmatmul.mubr.bf16.gmra.mrb[0].mxu0 %v245
    %v558 = vpop.f32.mrb[0].mxu0
    %v559 = vadd.f32 0.0, %v558
    %v560 = vpop.f32.mrb[0].mxu0
    %v561 = vadd.f32 0.0, %v560
    %v562 = vpop.f32.mrb[0].mxu0
    %v563 = vadd.f32 0.0, %v562
    %v564 = vpop.f32.mrb[0].mxu0
    %v565 = vadd.f32 0.0, %v564
    %566 = vmatprep.mubr.bf16.mxu0 0
    %567 = vmatmul.mubr.bf16.gmra.mrb[0].mxu0 %v246
    %v568 = vpop.f32.mrb[0].mxu0
    %v569 = vadd.f32 0.0, %v568
    %v570 = vpop.f32.mrb[0].mxu0
    %v571 = vadd.f32 0.0, %v570
    %v572 = vpop.f32.mrb[0].mxu0
    %v573 = vadd.f32 0.0, %v572
    %v574 = vpop.f32.mrb[0].mxu0
    %v575 = vadd.f32 0.0, %v574
    %576 = vmatprep.mubr.bf16.mxu0 0
    %577 = vmatmul.mubr.bf16.gmra.mrb[0].mxu0 %v247
    %v578 = vpop.f32.mrb[0].mxu0
    %v579 = vadd.f32 0.0, %v578
    %v580 = vpop.f32.mrb[0].mxu0
    %v581 = vadd.f32 0.0, %v580
    %v582 = vpop.f32.mrb[0].mxu0
    %v583 = vadd.f32 0.0, %v582
    %v584 = vpop.f32.mrb[0].mxu0
    %v585 = vadd.f32 0.0, %v584
    %586 = vmatprep.mubr.bf16.mxu0 0
    %587 = vmatmul.mubr.bf16.gmra.mrb[0].mxu0 %v248
    %v588 = vpop.f32.mrb[0].mxu0
    %v589 = vadd.f32 0.0, %v588
    %v590 = vpop.f32.mrb[0].mxu0
    %v591 = vadd.f32 0.0, %v590
    %v592 = vpop.f32.mrb[0].mxu0
    %v593 = vadd.f32 0.0, %v592
    %v594 = vpop.f32.mrb[0].mxu0
    %v595 = vadd.f32 0.0, %v594
    %596 = vmatprep.mubr.bf16.mxu0 0
    %597 = vmatmul.mubr.bf16.gmra.mrb[0].mxu0 %v249
    %v598 = vpop.f32.mrb[0].mxu0
    %v599 = vadd.f32 0.0, %v598
    %v600 = vpop.f32.mrb[0].mxu0
    %v601 = vadd.f32 0.0, %v600
    %v602 = vpop.f32.mrb[0].mxu0
    %v603 = vadd.f32 0.0, %v602
    %v604 = vpop.f32.mrb[0].mxu0
    %v605 = vadd.f32 0.0, %v604
    %606 = vmatprep.mubr.bf16.mxu0 0
    %607 = vmatmul.mubr.bf16.gmra.mrb[0].mxu0 %v250
    %v608 = vpop.f32.mrb[0].mxu0
    %v609 = vadd.f32 0.0, %v608
    %v610 = vpop.f32.mrb[0].mxu0
    %v611 = vadd.f32 0.0, %v610
    %v612 = vpop.f32.mrb[0].mxu0
    %v613 = vadd.f32 0.0, %v612
    %v614 = vpop.f32.mrb[0].mxu0
    %v615 = vadd.f32 0.0, %v614
    %616 = vmatprep.mubr.bf16.mxu0 0
    %617 = vmatmul.mubr.bf16.gmra.mrb[0].mxu0 %v251
    %v618 = vpop.f32.mrb[0].mxu0
    %v619 = vadd.f32 0.0, %v618
    %v620 = vpop.f32.mrb[0].mxu0
    %v621 = vadd.f32 0.0, %v620
    %v622 = vpop.f32.mrb[0].mxu0
    %v623 = vadd.f32 0.0, %v622
    %v624 = vpop.f32.mrb[0].mxu0
    %v625 = vadd.f32 0.0, %v624
    %626 = vmatprep.mubr.bf16.mxu0 0
    %627 = vmatmul.mubr.bf16.gmra.mrb[0].mxu0 %v252
    %v628 = vpop.f32.mrb[0].mxu0
    %v629 = vadd.f32 0.0, %v628
    %v630 = vpop.f32.mrb[0].mxu0
    %v631 = vadd.f32 0.0, %v630
    %v632 = vpop.f32.mrb[0].mxu0
    %v633 = vadd.f32 0.0, %v632
    %v634 = vpop.f32.mrb[0].mxu0
    %v635 = vadd.f32 0.0, %v634
    %636 = vmatprep.mubr.bf16.mxu0 0
    %637 = vmatmul.mubr.bf16.gmra.mrb[0].mxu0 %v253
    %v638 = vpop.f32.mrb[0].mxu0
    %v639 = vadd.f32 0.0, %v638
    %v640 = vpop.f32.mrb[0].mxu0
    %v641 = vadd.f32 0.0, %v640
    %v642 = vpop.f32.mrb[0].mxu0
    %v643 = vadd.f32 0.0, %v642
    %v644 = vpop.f32.mrb[0].mxu0
    %v645 = vadd.f32 0.0, %v644
    %646 = vmatprep.mubr.bf16.mxu0 0
    %647 = vmatmul.mubr.bf16.gmra.mrb[0].mxu0 %v254
    %v648 = vpop.f32.mrb[0].mxu0
    %v649 = vadd.f32 0.0, %v648
    %v650 = vpop.f32.mrb[0].mxu0
    %v651 = vadd.f32 0.0, %v650
    %v652 = vpop.f32.mrb[0].mxu0
    %v653 = vadd.f32 0.0, %v652
    %v654 = vpop.f32.mrb[0].mxu0
    %v655 = vadd.f32 0.0, %v654
    %656 = vmatprep.mubr.bf16.mxu0 0
    %657 = vmatmul.mubr.bf16.gmra.mrb[0].mxu0 %v255
    %v658 = vpop.f32.mrb[0].mxu0
    %v659 = vadd.f32 0.0, %v658
    %v660 = vpop.f32.mrb[0].mxu0
    %v661 = vadd.f32 0.0, %v660
    %v662 = vpop.f32.mrb[0].mxu0
    %v663 = vadd.f32 0.0, %v662
    %v664 = vpop.f32.mrb[0].mxu0
    %v665 = vadd.f32 0.0, %v664
    %666 = vmatprep.mubr.bf16.mxu0 0
    %667 = vmatmul.mubr.bf16.gmra.mrb[0].mxu0 %v256
    %v668 = vpop.f32.mrb[0].mxu0
    %v669 = vadd.f32 0.0, %v668
    %v670 = vpop.f32.mrb[0].mxu0
    %v671 = vadd.f32 0.0, %v670
    %v672 = vpop.f32.mrb[0].mxu0
    %v673 = vadd.f32 0.0, %v672
    %v674 = vpop.f32.mrb[0].mxu0
    %v675 = vadd.f32 0.0, %v674
    %676 = vmatprep.mubr.bf16.mxu0 0
    %677 = vmatmul.mubr.bf16.gmra.mrb[0].mxu0 %v257
    %v678 = vpop.f32.mrb[0].mxu0
    %v679 = vadd.f32 0.0, %v678
    %v680 = vpop.f32.mrb[0].mxu0
    %v681 = vadd.f32 0.0, %v680
    %v682 = vpop.f32.mrb[0].mxu0
    %v683 = vadd.f32 0.0, %v682
    %v684 = vpop.f32.mrb[0].mxu0
    %v685 = vadd.f32 0.0, %v684
    %686 = vmatprep.mubr.bf16.mxu0 0
    %687 = vmatmul.mubr.bf16.gmra.mrb[0].mxu0 %v258
    %v688 = vpop.f32.mrb[0].mxu0
    %v689 = vadd.f32 0.0, %v688
    %v690 = vpop.f32.mrb[0].mxu0
    %v691 = vadd.f32 0.0, %v690
    %v692 = vpop.f32.mrb[0].mxu0
    %v693 = vadd.f32 0.0, %v692
    %v694 = vpop.f32.mrb[0].mxu0
    %v695 = vadd.f32 0.0, %v694
    %696 = vmatprep.mubr.bf16.mxu0 0
    %697 = vmatmul.mubr.bf16.gmra.mrb[0].mxu0 %v259
    %v698 = vpop.f32.mrb[0].mxu0
    %v699 = vadd.f32 0.0, %v698
    %v700 = vpop.f32.mrb[0].mxu0
    %v701 = vadd.f32 0.0, %v700
    %v702 = vpop.f32.mrb[0].mxu0
    %v703 = vadd.f32 0.0, %v702
    %v704 = vpop.f32.mrb[0].mxu0
    %v705 = vadd.f32 0.0, %v704
    %706 = vmatprep.mubr.bf16.mxu0 0
    %707 = vmatmul.mubr.bf16.gmra.mrb[0].mxu0 %v260
    %v708 = vpop.f32.mrb[0].mxu0
    %v709 = vadd.f32 0.0, %v708
    %v710 = vpop.f32.mrb[0].mxu0
    %v711 = vadd.f32 0.0, %v710
    %v712 = vpop.f32.mrb[0].mxu0
    %v713 = vadd.f32 0.0, %v712
    %v714 = vpop.f32.mrb[0].mxu0
    %v715 = vadd.f32 0.0, %v714
    %716 = vmatprep.mubr.bf16.mxu0 0
    %717 = vmatmul.mubr.bf16.gmra.mrb[0].mxu0 %v261
    %v718 = vpop.f32.mrb[0].mxu0
    %v719 = vadd.f32 0.0, %v718
    %v720 = vpop.f32.mrb[0].mxu0
    %v721 = vadd.f32 0.0, %v720
    %v722 = vpop.f32.mrb[0].mxu0
    %v723 = vadd.f32 0.0, %v722
    %v724 = vpop.f32.mrb[0].mxu0
    %v725 = vadd.f32 0.0, %v724
    %726 = vdwg.mxu0
    %v727 = vmax.f32 %v409, 0.0
    %v728 = vmax.f32 %v411, 0.0
    %v729 = vmax.f32 %v413, 0.0
    %v730 = vmax.f32 %v415, 0.0
    %v731 = vmax.f32 %v419, 0.0
    %v732 = vmax.f32 %v421, 0.0
    %v733 = vmax.f32 %v423, 0.0
    %v734 = vmax.f32 %v425, 0.0
    %v735 = vmax.f32 %v429, 0.0
    %v736 = vmax.f32 %v431, 0.0
    %v737 = vmax.f32 %v433, 0.0
    %v738 = vmax.f32 %v435, 0.0
    %v739 = vmax.f32 %v439, 0.0
    %v740 = vmax.f32 %v441, 0.0
    %v741 = vmax.f32 %v443, 0.0
    %v742 = vmax.f32 %v445, 0.0
    %v743 = vmax.f32 %v449, 0.0
    %v744 = vmax.f32 %v451, 0.0
    %v745 = vmax.f32 %v453, 0.0
    %v746 = vmax.f32 %v455, 0.0
    %v747 = vmax.f32 %v459, 0.0
    %v748 = vmax.f32 %v461, 0.0
    %v749 = vmax.f32 %v463, 0.0
    %v750 = vmax.f32 %v465, 0.0
    %v751 = vmax.f32 %v469, 0.0
    %v752 = vmax.f32 %v471, 0.0
    %v753 = vmax.f32 %v473, 0.0
    %v754 = vmax.f32 %v475, 0.0
    %v755 = vmax.f32 %v479, 0.0
    %v756 = vmax.f32 %v481, 0.0
    %v757 = vmax.f32 %v483, 0.0
    %v758 = vmax.f32 %v485, 0.0
    %v759 = vmax.f32 %v489, 0.0
    %v760 = vmax.f32 %v491, 0.0
    %v761 = vmax.f32 %v493, 0.0
    %v762 = vmax.f32 %v495, 0.0
    %v763 = vmax.f32 %v499, 0.0
    %v764 = vmax.f32 %v501, 0.0
    %v765 = vmax.f32 %v503, 0.0
    %v766 = vmax.f32 %v505, 0.0
    %v767 = vmax.f32 %v509, 0.0
    %v768 = vmax.f32 %v511, 0.0
    %v769 = vmax.f32 %v513, 0.0
    %v770 = vmax.f32 %v515, 0.0
    %v771 = vmax.f32 %v519, 0.0
    %v772 = vmax.f32 %v521, 0.0
    %v773 = vmax.f32 %v523, 0.0
    %v774 = vmax.f32 %v525, 0.0
    %v775 = vmax.f32 %v529, 0.0
    %v776 = vmax.f32 %v531, 0.0
    %v777 = vmax.f32 %v533, 0.0
    %v778 = vmax.f32 %v535, 0.0
    %v779 = vmax.f32 %v539, 0.0
    %v780 = vmax.f32 %v541, 0.0
    %v781 = vmax.f32 %v543, 0.0
    %v782 = vmax.f32 %v545, 0.0
    %v783 = vmax.f32 %v549, 0.0
    %v784 = vmax.f32 %v551, 0.0
    %v785 = vmax.f32 %v553, 0.0
    %v786 = vmax.f32 %v555, 0.0
    %v787 = vmax.f32 %v559, 0.0
    %v788 = vmax.f32 %v561, 0.0
    %v789 = vmax.f32 %v563, 0.0
    %v790 = vmax.f32 %v565, 0.0
    %v791 = vmax.f32 %v569, 0.0
    %v792 = vmax.f32 %v571, 0.0
    %v793 = vmax.f32 %v573, 0.0
    %v794 = vmax.f32 %v575, 0.0
    %v795 = vmax.f32 %v579, 0.0
    %v796 = vmax.f32 %v581, 0.0
    %v797 = vmax.f32 %v583, 0.0
    %v798 = vmax.f32 %v585, 0.0
    %v799 = vmax.f32 %v589, 0.0
    %v800 = vmax.f32 %v591, 0.0
    %v801 = vmax.f32 %v593, 0.0
    %v802 = vmax.f32 %v595, 0.0
    %v803 = vmax.f32 %v599, 0.0
    %v804 = vmax.f32 %v601, 0.0
    %v805 = vmax.f32 %v603, 0.0
    %v806 = vmax.f32 %v605, 0.0
    %v807 = vmax.f32 %v609, 0.0
    %v808 = vmax.f32 %v611, 0.0
    %v809 = vmax.f32 %v613, 0.0
    %v810 = vmax.f32 %v615, 0.0
    %v811 = vmax.f32 %v619, 0.0
    %v812 = vmax.f32 %v621, 0.0
    %v813 = vmax.f32 %v623, 0.0
    %v814 = vmax.f32 %v625, 0.0
    %v815 = vmax.f32 %v629, 0.0
    %v816 = vmax.f32 %v631, 0.0
    %v817 = vmax.f32 %v633, 0.0
    %v818 = vmax.f32 %v635, 0.0
    %v819 = vmax.f32 %v639, 0.0
    %v820 = vmax.f32 %v641, 0.0
    %v821 = vmax.f32 %v643, 0.0
    %v822 = vmax.f32 %v645, 0.0
    %v823 = vmax.f32 %v649, 0.0
    %v824 = vmax.f32 %v651, 0.0
    %v825 = vmax.f32 %v653, 0.0
    %v826 = vmax.f32 %v655, 0.0
    %v827 = vmax.f32 %v659, 0.0
    %v828 = vmax.f32 %v661, 0.0
    %v829 = vmax.f32 %v663, 0.0
    %v830 = vmax.f32 %v665, 0.0
    %v831 = vmax.f32 %v669, 0.0
    %v832 = vmax.f32 %v671, 0.0
    %v833 = vmax.f32 %v673, 0.0
    %v834 = vmax.f32 %v675, 0.0
    %v835 = vmax.f32 %v679, 0.0
    %v836 = vmax.f32 %v681, 0.0
    %v837 = vmax.f32 %v683, 0.0
    %v838 = vmax.f32 %v685, 0.0
    %v839 = vmax.f32 %v689, 0.0
    %v840 = vmax.f32 %v691, 0.0
    %v841 = vmax.f32 %v693, 0.0
    %v842 = vmax.f32 %v695, 0.0
    %v843 = vmax.f32 %v699, 0.0
    %v844 = vmax.f32 %v701, 0.0
    %v845 = vmax.f32 %v703, 0.0
    %v846 = vmax.f32 %v705, 0.0
    %v847 = vmax.f32 %v709, 0.0
    %v848 = vmax.f32 %v711, 0.0
    %v849 = vmax.f32 %v713, 0.0
    %v850 = vmax.f32 %v715, 0.0
    %v851 = vmax.f32 %v719, 0.0
    %v852 = vmax.f32 %v721, 0.0
    %v853 = vmax.f32 %v723, 0.0
    %v854 = vmax.f32 %v725, 0.0
    %v855 = vld [vmem:[%s2] sm:$0xff]
    %v857 = vcombine.high %v855, %v855
    %v859 = vunpack.c.l.s4 1983009808
    %v860 = vunpack.c.0.s8 %v859
    %v861 = vlaneseq
    %v862 = vshrl.u32 %v861, 7
    %v863 = vsub.s32 %v860, %v862
    %v864 = vrot.slane %v855, %v863
    %v866 = vunpack.c.l.s4 1983009808
    %v867 = vunpack.c.0.s8 %v866
    %v868 = vlaneseq
    %v869 = vshrl.u32 %v868, 7
    %v870 = vsub.s32 %v867, %v869
    %v871 = vrot.slane %v857, %v870
    %v872 = vcombine.high %v864, %v864
    %v873 = vcombine.high %v871, %v871
    %878 = vmatprep.subr.mxu0 %v728
    %879 = vmatpush1.msra.mxu0 %v727
    %880 = vmatprep.subr.mxu0 %v730
    %881 = vmatpush1.msra.mxu0 %v729
    %882 = vmatprep.subr.mxu0 %v732
    %883 = vmatpush1.msra.mxu0 %v731
    %884 = vmatprep.subr.mxu0 %v734
    %885 = vmatpush1.msra.mxu0 %v733
    %886 = vmatprep.subr.mxu0 %v736
    %887 = vmatpush1.msra.mxu0 %v735
    %888 = vmatprep.subr.mxu0 %v738
    %889 = vmatpush1.msra.mxu0 %v737
    %890 = vmatprep.subr.mxu0 %v740
    %891 = vmatpush1.msra.mxu0 %v739
    %892 = vmatprep.subr.mxu0 %v742
    %893 = vmatpush1.msra.mxu0 %v741
    %894 = vmatprep.subr.mxu0 %v744
    %895 = vmatpush1.msra.mxu0 %v743
    %896 = vmatprep.subr.mxu0 %v746
    %897 = vmatpush1.msra.mxu0 %v745
    %898 = vmatprep.subr.mxu0 %v748
    %899 = vmatpush1.msra.mxu0 %v747
    %900 = vmatprep.subr.mxu0 %v750
    %901 = vmatpush1.msra.mxu0 %v749
    %902 = vmatprep.subr.mxu0 %v752
    %903 = vmatpush1.msra.mxu0 %v751
    %904 = vmatprep.subr.mxu0 %v754
    %905 = vmatpush1.msra.mxu0 %v753
    %906 = vmatprep.subr.mxu0 %v756
    %907 = vmatpush1.msra.mxu0 %v755
    %908 = vmatprep.subr.mxu0 %v758
    %909 = vmatpush1.msra.mxu0 %v757
    %910 = vmatprep.subr.mxu0 %v760
    %911 = vmatpush1.msra.mxu0 %v759
    %912 = vmatprep.subr.mxu0 %v762
    %913 = vmatpush1.msra.mxu0 %v761
    %914 = vmatprep.subr.mxu0 %v764
    %915 = vmatpush1.msra.mxu0 %v763
    %916 = vmatprep.subr.mxu0 %v766
    %917 = vmatpush1.msra.mxu0 %v765
    %918 = vmatprep.subr.mxu0 %v768
    %919 = vmatpush1.msra.mxu0 %v767
    %920 = vmatprep.subr.mxu0 %v770
    %921 = vmatpush1.msra.mxu0 %v769
    %922 = vmatprep.subr.mxu0 %v772
    %923 = vmatpush1.msra.mxu0 %v771
    %924 = vmatprep.subr.mxu0 %v774
    %925 = vmatpush1.msra.mxu0 %v773
    %926 = vmatprep.subr.mxu0 %v776
    %927 = vmatpush1.msra.mxu0 %v775
    %928 = vmatprep.subr.mxu0 %v778
    %929 = vmatpush1.msra.mxu0 %v777
    %930 = vmatprep.subr.mxu0 %v780
    %931 = vmatpush1.msra.mxu0 %v779
    %932 = vmatprep.subr.mxu0 %v782
    %933 = vmatpush1.msra.mxu0 %v781
    %934 = vmatprep.subr.mxu0 %v784
    %935 = vmatpush1.msra.mxu0 %v783
    %936 = vmatprep.subr.mxu0 %v786
    %937 = vmatpush1.msra.mxu0 %v785
    %938 = vmatprep.subr.mxu0 %v788
    %939 = vmatpush1.msra.mxu0 %v787
    %940 = vmatprep.subr.mxu0 %v790
    %941 = vmatpush1.msra.mxu0 %v789
    %942 = vmatprep.mubr.f32.mxu0 %v872
    %943 = vmatmul.mubr.f32.gmra.mrb[0].mxu0 %v864
    %v944 = vpop.f32.mrb[0].mxu0
    %v945 = vadd.f32 0.0, %v944
    %v946 = vpop.f32.mrb[0].mxu0
    %v947 = vadd.f32 0.0, %v946
    %948 = vdwg.mxu0
    %949 = vmatprep.subr.mxu0 %v792
    %950 = vmatpush1.msra.mxu0 %v791
    %951 = vmatprep.subr.mxu0 %v794
    %952 = vmatpush1.msra.mxu0 %v793
    %953 = vmatprep.subr.mxu0 %v796
    %954 = vmatpush1.msra.mxu0 %v795
    %955 = vmatprep.subr.mxu0 %v798
    %956 = vmatpush1.msra.mxu0 %v797
    %957 = vmatprep.subr.mxu0 %v800
    %958 = vmatpush1.msra.mxu0 %v799
    %959 = vmatprep.subr.mxu0 %v802
    %960 = vmatpush1.msra.mxu0 %v801
    %961 = vmatprep.subr.mxu0 %v804
    %962 = vmatpush1.msra.mxu0 %v803
    %963 = vmatprep.subr.mxu0 %v806
    %964 = vmatpush1.msra.mxu0 %v805
    %965 = vmatprep.subr.mxu0 %v808
    %966 = vmatpush1.msra.mxu0 %v807
    %967 = vmatprep.subr.mxu0 %v810
    %968 = vmatpush1.msra.mxu0 %v809
    %969 = vmatprep.subr.mxu0 %v812
    %970 = vmatpush1.msra.mxu0 %v811
    %971 = vmatprep.subr.mxu0 %v814
    %972 = vmatpush1.msra.mxu0 %v813
    %973 = vmatprep.subr.mxu0 %v816
    %974 = vmatpush1.msra.mxu0 %v815
    %975 = vmatprep.subr.mxu0 %v818
    %976 = vmatpush1.msra.mxu0 %v817
    %977 = vmatprep.subr.mxu0 %v820
    %978 = vmatpush1.msra.mxu0 %v819
    %979 = vmatprep.subr.mxu0 %v822
    %980 = vmatpush1.msra.mxu0 %v821
    %981 = vmatprep.subr.mxu0 %v824
    %982 = vmatpush1.msra.mxu0 %v823
    %983 = vmatprep.subr.mxu0 %v826
    %984 = vmatpush1.msra.mxu0 %v825
    %985 = vmatprep.subr.mxu0 %v828
    %986 = vmatpush1.msra.mxu0 %v827
    %987 = vmatprep.subr.mxu0 %v830
    %988 = vmatpush1.msra.mxu0 %v829
    %989 = vmatprep.subr.mxu0 %v832
    %990 = vmatpush1.msra.mxu0 %v831
    %991 = vmatprep.subr.mxu0 %v834
    %992 = vmatpush1.msra.mxu0 %v833
    %993 = vmatprep.subr.mxu0 %v836
    %994 = vmatpush1.msra.mxu0 %v835
    %995 = vmatprep.subr.mxu0 %v838
    %996 = vmatpush1.msra.mxu0 %v837
    %997 = vmatprep.subr.mxu0 %v840
    %998 = vmatpush1.msra.mxu0 %v839
    %999 = vmatprep.subr.mxu0 %v842
    %1000 = vmatpush1.msra.mxu0 %v841
    %1001 = vmatprep.subr.mxu0 %v844
    %1002 = vmatpush1.msra.mxu0 %v843
    %1003 = vmatprep.subr.mxu0 %v846
    %1004 = vmatpush1.msra.mxu0 %v845
    %1005 = vmatprep.subr.mxu0 %v848
    %1006 = vmatpush1.msra.mxu0 %v847
    %1007 = vmatprep.subr.mxu0 %v850
    %1008 = vmatpush1.msra.mxu0 %v849
    %1009 = vmatprep.subr.mxu0 %v852
    %1010 = vmatpush1.msra.mxu0 %v851
    %1011 = vmatprep.subr.mxu0 %v854
    %1012 = vmatpush1.msra.mxu0 %v853
    %1013 = vmatprep.mubr.f32.mxu0 %v873
    %1014 = vmatmul.mubr.f32.gmra.mrb[0].mxu0 %v871
    %v1015 = vpop.f32.mrb[0].mxu0
    %v1016 = vadd.f32 %v945, %v1015
    %v1017 = vpop.f32.mrb[0].mxu0
    %v1018 = vadd.f32 %v947, %v1017
    %1019 = vdwg.mxu0
    %v1020 = vld [vmem:[%s3] sm:$0xff]
    %v1021 = vld [vmem:[%s3 + $0x8] sm:$0xff]
    %v1022 = vld [vmem:[%s3 + $0x10] sm:$0xff]
    %v1023 = vld [vmem:[%s3 + $0x18] sm:$0xff]
    %v1024 = vld [vmem:[%s3 + $0x20] sm:$0xff]
    %v1025 = vld [vmem:[%s3 + $0x28] sm:$0xff]
    %v1026 = vld [vmem:[%s3 + $0x30] sm:$0xff]
    %v1027 = vld [vmem:[%s3 + $0x38] sm:$0xff]
    %v1028 = vld [vmem:[%s3 + $0x40] sm:$0xff]
    %v1029 = vld [vmem:[%s3 + $0x48] sm:$0xff]
    %v1030 = vld [vmem:[%s3 + $0x50] sm:$0xff]
    %v1031 = vld [vmem:[%s3 + $0x58] sm:$0xff]
    %v1032 = vld [vmem:[%s3 + $0x60] sm:$0xff]
    %v1033 = vld [vmem:[%s3 + $0x68] sm:$0xff]
    %v1034 = vld [vmem:[%s3 + $0x70] sm:$0xff]
    %v1035 = vld [vmem:[%s3 + $0x78] sm:$0xff]
    %v1036 = vld [vmem:[%s3 + $0x80] sm:$0xff]
    %v1037 = vld [vmem:[%s3 + $0x88] sm:$0xff]
    %v1038 = vld [vmem:[%s3 + $0x90] sm:$0xff]
    %v1039 = vld [vmem:[%s3 + $0x98] sm:$0xff]
    %v1040 = vld [vmem:[%s3 + $0xa0] sm:$0xff]
    %v1041 = vld [vmem:[%s3 + $0xa8] sm:$0xff]
    %v1042 = vld [vmem:[%s3 + $0xb0] sm:$0xff]
    %v1043 = vld [vmem:[%s3 + $0xb8] sm:$0xff]
    %v1044 = vld [vmem:[%s3 + $0xc0] sm:$0xff]
    %v1045 = vld [vmem:[%s3 + $0xc8] sm:$0xff]
    %v1046 = vld [vmem:[%s3 + $0xd0] sm:$0xff]
    %v1047 = vld [vmem:[%s3 + $0xd8] sm:$0xff]
    %v1048 = vld [vmem:[%s3 + $0xe0] sm:$0xff]
    %v1049 = vld [vmem:[%s3 + $0xe8] sm:$0xff]
    %v1050 = vld [vmem:[%s3 + $0xf0] sm:$0xff]
    %v1051 = vld [vmem:[%s3 + $0xf8] sm:$0xff]
    %v1052 = vld [vmem:[%s4] sm:$0x1]
    %v1054 = vlaneseq
    %v1055 = vshrl.u32 %v1054, 7
    %v1056 = vsub.s32 0, %v1055
    %v1057 = vrot.slane %v1052, %v1056
    %1059 = vmatprep.subr.mxu0 0.0
    %1060 = vmatpush1.msra.mxu0 %v1020
    %1061 = vmatprep.subr.mxu0 0.0
    %1062 = vmatpush1.msra.mxu0 %v1021
    %1063 = vmatprep.subr.mxu0 0.0
    %1064 = vmatpush1.msra.mxu0 %v1022
    %1065 = vmatprep.subr.mxu0 0.0
    %1066 = vmatpush1.msra.mxu0 %v1023
    %1067 = vmatprep.subr.mxu0 0.0
    %1068 = vmatpush1.msra.mxu0 %v1024
    %1069 = vmatprep.subr.mxu0 0.0
    %1070 = vmatpush1.msra.mxu0 %v1025
    %1071 = vmatprep.subr.mxu0 0.0
    %1072 = vmatpush1.msra.mxu0 %v1026
    %1073 = vmatprep.subr.mxu0 0.0
    %1074 = vmatpush1.msra.mxu0 %v1027
    %1075 = vmatprep.subr.mxu0 0.0
    %1076 = vmatpush1.msra.mxu0 %v1028
    %1077 = vmatprep.subr.mxu0 0.0
    %1078 = vmatpush1.msra.mxu0 %v1029
    %1079 = vmatprep.subr.mxu0 0.0
    %1080 = vmatpush1.msra.mxu0 %v1030
    %1081 = vmatprep.subr.mxu0 0.0
    %1082 = vmatpush1.msra.mxu0 %v1031
    %1083 = vmatprep.subr.mxu0 0.0
    %1084 = vmatpush1.msra.mxu0 %v1032
    %1085 = vmatprep.subr.mxu0 0.0
    %1086 = vmatpush1.msra.mxu0 %v1033
    %1087 = vmatprep.subr.mxu0 0.0
    %1088 = vmatpush1.msra.mxu0 %v1034
    %1089 = vmatprep.subr.mxu0 0.0
    %1090 = vmatpush1.msra.mxu0 %v1035
    %1091 = vmatprep.subr.mxu0 0.0
    %1092 = vmatpush1.msra.mxu0 %v1036
    %1093 = vmatprep.subr.mxu0 0.0
    %1094 = vmatpush1.msra.mxu0 %v1037
    %1095 = vmatprep.subr.mxu0 0.0
    %1096 = vmatpush1.msra.mxu0 %v1038
    %1097 = vmatprep.subr.mxu0 0.0
    %1098 = vmatpush1.msra.mxu0 %v1039
    %1099 = vmatprep.subr.mxu0 0.0
    %1100 = vmatpush1.msra.mxu0 %v1040
    %1101 = vmatprep.subr.mxu0 0.0
    %1102 = vmatpush1.msra.mxu0 %v1041
    %1103 = vmatprep.subr.mxu0 0.0
    %1104 = vmatpush1.msra.mxu0 %v1042
    %1105 = vmatprep.subr.mxu0 0.0
    %1106 = vmatpush1.msra.mxu0 %v1043
    %1107 = vmatprep.subr.mxu0 0.0
    %1108 = vmatpush1.msra.mxu0 %v1044
    %1109 = vmatprep.subr.mxu0 0.0
    %1110 = vmatpush1.msra.mxu0 %v1045
    %1111 = vmatprep.subr.mxu0 0.0
    %1112 = vmatpush1.msra.mxu0 %v1046
    %1113 = vmatprep.subr.mxu0 0.0
    %1114 = vmatpush1.msra.mxu0 %v1047
    %1115 = vmatprep.subr.mxu0 0.0
    %1116 = vmatpush1.msra.mxu0 %v1048
    %1117 = vmatprep.subr.mxu0 0.0
    %1118 = vmatpush1.msra.mxu0 %v1049
    %1119 = vmatprep.subr.mxu0 0.0
    %1120 = vmatpush1.msra.mxu0 %v1050
    %1121 = vmatprep.subr.mxu0 0.0
    %1122 = vmatpush1.msra.mxu0 %v1051
    %1123 = vmatprep.mubr.f32.mxu0 %v1018
    %1124 = vmatmul.mubr.f32.gmra.mrb[0].mxu0 %v1016
    %v1125 = vpop.f32.mrb[0].mxu0
    %v1126 = vadd.f32 %v1057, %v1125
    %v1127 = vpop.f32.mrb[0].mxu0
    %1128 = vdwg.mxu0
    %1129 = vst [vmem:[#allocation2] sm:$0x3] %v1126
    // Predicated region
    $region22: #{forward.1} parent=1 // pred_check
      _
    $region23: #{forward.1} parent=1 // pred_check_branch
      %1131 = sbr.rel (0) target = $region25
    $region24: #{forward.1} parent=1 // pred_region
      %s1133 = ssub.s32 32, 32
      %1134 = vsyncadd [#allocation3], %s1133
      %s1136 = sshll.u32 [#allocation2], 4
      %s1137 = int_to_ptr.vmem [resolvable:$true] %s1136
      %1139 = dma.vmem_to_hbm [thread:$0]  %s1137, 32, %s5, [#allocation3]
    $region25: #{forward.1} parent=1 // pred_fallthru
      _
    // Predicated region
    $region26: #{forward.1} parent=1 // pred_check
      _
    $region27: #{forward.1} parent=1 // pred_check_branch
      %1141 = sbr.rel (0) target = $region29
    $region28: #{forward.1} parent=1 // pred_region
      %1142 = dma.done [#allocation3], 32
    $region29: #{forward.1} parent=1 // pred_fallthru
      _
    %1143 = vsyncpa [#allocation3], 1

</llo_original>
